<compile_context>
chip_gen: v7x
topology: tpu7x:2x2x1
jax: 0.10.0
libtpu: 0.0.40
codegen_flags: <defaults>
</compile_context>

<pallas_src>
import functools
import math

import jax
import jax.numpy as jnp
from jax.experimental import pallas as pl
from jax.experimental.pallas import tpu as pltpu


# 64 MiB scoped VMEM: comfortably inside v5e/v6e (128 MiB physical) and equal to
# v7x physical; tiles below are chosen so actual usage stays well under this.
_VMEM_LIMIT = 64 * 1024 * 1024


# ----------------------------------------------------------------------------
# helpers
# ----------------------------------------------------------------------------
def _round_up(n, m):
    return ((n + m - 1) // m) * m


def _row_tile(n, target):
    """Token-dim tile: `target` rows when n >= target, else n rounded up to 8."""
    return target if n >= target else _round_up(n, 8)


def _pad_rows(x, rows):
    n = x.shape[0]
    if n == rows:
        return x
    return jnp.pad(x, ((0, rows - n),) + ((0, 0),) * (x.ndim - 1))


# ----------------------------------------------------------------------------
# token-tiled linear:  y = x @ W + b   (bf16 operands, f32 accumulate)
# ----------------------------------------------------------------------------
def _linear_kernel(x_ref, w_ref, b_ref, o_ref):
    x = x_ref[...].astype(jnp.bfloat16)
    acc = jnp.dot(x, w_ref[...], preferred_element_type=jnp.float32)
    o_ref[...] = (acc + b_ref[...].astype(jnp.float32)).astype(o_ref.dtype)


def linear(x2d, w, b, *, out_dtype=None, tile=512):
    """x2d: [N, Din] (any float dtype), w: [Din, Dout] bf16, b: [1, Dout] f32."""
    N, Din = x2d.shape
    Dout = w.shape[1]
    out_dtype = out_dtype or x2d.dtype
    tn = _row_tile(N, tile)
    Np = _round_up(N, tn)
    xp = _pad_rows(x2d, Np)
    out = pl.pallas_call(
        _linear_kernel,
        out_shape=jax.ShapeDtypeStruct((Np, Dout), out_dtype),
        grid=(Np // tn,),
        in_specs=[pl.BlockSpec((tn, Din), lambda i: (i, 0)),
                  pl.BlockSpec((Din, Dout), lambda i: (0, 0)),
                  pl.BlockSpec((1, Dout), lambda i: (0, 0))],
        out_specs=pl.BlockSpec((tn, Dout), lambda i: (i, 0)),
        compiler_params=pltpu.CompilerParams(
            dimension_semantics=("parallel",),
            vmem_limit_bytes=_VMEM_LIMIT),
    )(xp, w, b)
    return out if Np == N else out[:N]


# ----------------------------------------------------------------------------
# fused (Q proj) + multi-head attention + Wo + residual + LayerNorm
#   grid = (B, Lq_tiles); K|V is a pre-projected, lane-packed [Lk, 2D] bf16 block
# ----------------------------------------------------------------------------
def _attn_block_kernel(x_ref, kv_ref, wq_ref, bq_ref, wo_ref, bo_ref,
                       g_ref, b_ref, *rest, n_heads, scale, causal, has_bias):
    if has_bias:
        bias_ref, o_ref = rest
    else:
        (o_ref,) = rest

    x = x_ref[0].astype(jnp.float32)             # [tq, D] residual / q source
    kv = kv_ref[0]                               # [Lk, 2D] bf16 (K | V packed)
    tq, d = x.shape
    lk = kv.shape[0]
    dh = d // n_heads

    # fused Q projection (bf16 MXU operands, f32 accumulation)
    q = (jnp.dot(x.astype(jnp.bfloat16), wq_ref[...],
                 preferred_element_type=jnp.float32)
         + bq_ref[...].astype(jnp.float32))
    q_bf = q.astype(jnp.bfloat16)
    k_bf = kv[:, :d]
    v_bf = kv[:, d:]

    if has_bias:
        add_bias = bias_ref[0].astype(jnp.float32)          # additive [tq, Lk]
    elif causal:
        # causal mask generated in-kernel (no HBM traffic for the bias)
        q0 = pl.program_id(1) * tq
        row = jax.lax.broadcasted_iota(jnp.int32, (tq, lk), 0) + q0
        col = jax.lax.broadcasted_iota(jnp.int32, (tq, lk), 1)
        add_bias = jnp.where(col <= row, 0.0, -1e30).astype(jnp.float32)
    else:
        add_bias = None

    # Per-head attention (static unroll, n_heads is small); head outputs are
    # packed lane-dense into one [tq, D] context so Wo is a single K=D matmul.
    heads = []
    for h in range(n_heads):
        lo = h * dh
        qh = q_bf[:, lo:lo + dh]
        kh = k_bf[:, lo:lo + dh]
        vh = v_bf[:, lo:lo + dh]
        s = jax.lax.dot_general(qh, kh, (((1,), (1,)), ((), ())),
                                preferred_element_type=jnp.float32) * scale
        if add_bias is not None:
            s = s + add_bias
        s = s - jnp.max(s, axis=-1, keepdims=True)
        p = jnp.exp(s)
        p = p * pl.reciprocal(jnp.sum(p, axis=-1, keepdims=True), approx=True)
        heads.append(jnp.dot(p.astype(jnp.bfloat16), vh,
                             preferred_element_type=jnp.float32))
    ctx = jnp.concatenate(heads, axis=-1)        # [tq, D] f32, lane-packed heads

    out = (jnp.dot(ctx.astype(jnp.bfloat16), wo_ref[...],
                   preferred_element_type=jnp.float32)
           + bo_ref[...].astype(jnp.float32))

    # residual + LayerNorm (PyTorch eps=1e-5)
    z = x + out
    mu = jnp.mean(z, axis=-1, keepdims=True)
    var = jnp.mean(jnp.square(z - mu), axis=-1, keepdims=True)
    zn = (z - mu) * jax.lax.rsqrt(var + 1e-5)
    o_ref[0] = (zn * g_ref[...].astype(jnp.float32)
                + b_ref[...].astype(jnp.float32)).astype(o_ref.dtype)


def attn_block_layernorm(x, kv, wq, bq, wo, bo, gamma, beta, *,
                         n_heads, scale, causal=False, bias=None, tq_target=256):
    """norm(x + MHA(q=x@Wq, K|V=kv) @ Wo + bo).

    x: [B, Lq, D] f32 (residual + Q source), kv: [B, Lk, 2D] bf16 (packed K|V),
    optional `bias`: additive [B, Lq, Lk] mask; `causal` generates the mask
    in-kernel (used when bias is None).
    """
    B, Lq, D = x.shape
    Lk = kv.shape[1]
    tq = _row_tile(Lq, tq_target)
    Lqp = _round_up(Lq, tq)
    if Lqp != Lq:
        x = jnp.pad(x, ((0, 0), (0, Lqp - Lq), (0, 0)))
        if bias is not None:
            bias = jnp.pad(bias, ((0, 0), (0, Lqp - Lq), (0, 0)))
    has_bias = bias is not None

    kern = functools.partial(_attn_block_kernel, n_heads=n_heads, scale=scale,
                             causal=causal, has_bias=has_bias)
    in_specs = [
        pl.BlockSpec((1, tq, D), lambda b, t: (b, t, 0)),       # x
        pl.BlockSpec((1, Lk, 2 * D), lambda b, t: (b, 0, 0)),   # packed K|V
        pl.BlockSpec((D, D), lambda b, t: (0, 0)),              # wq
        pl.BlockSpec((1, D), lambda b, t: (0, 0)),              # bq
        pl.BlockSpec((D, D), lambda b, t: (0, 0)),              # wo
        pl.BlockSpec((1, D), lambda b, t: (0, 0)),              # bo
        pl.BlockSpec((1, D), lambda b, t: (0, 0)),              # gamma
        pl.BlockSpec((1, D), lambda b, t: (0, 0)),              # beta
    ]
    args = [x, kv, wq, bq, wo, bo, gamma, beta]
    if has_bias:
        in_specs.append(pl.BlockSpec((1, tq, Lk), lambda b, t: (b, t, 0)))
        args.append(bias)

    out = pl.pallas_call(
        kern,
        out_shape=jax.ShapeDtypeStruct((B, Lqp, D), x.dtype),
        grid=(B, Lqp // tq),
        in_specs=in_specs,
        out_specs=pl.BlockSpec((1, tq, D), lambda b, t: (b, t, 0)),
        compiler_params=pltpu.CompilerParams(
            dimension_semantics=("parallel", "parallel"),
            vmem_limit_bytes=_VMEM_LIMIT),
    )(*args)
    return out if Lqp == Lq else out[:, :Lq, :]


# ----------------------------------------------------------------------------
# fused FFN (conv1 k=1 -> relu -> conv2 k=1) + residual + LayerNorm, token-tiled
# ----------------------------------------------------------------------------
def _ffn_ln_kernel(x_ref, w1_ref, b1_ref, w2_ref, b2_ref, g_ref, beta_ref, o_ref):
    x = x_ref[...].astype(jnp.float32)
    h = (jnp.dot(x.astype(jnp.bfloat16), w1_ref[...],
                 preferred_element_type=jnp.float32)
         + b1_ref[...].astype(jnp.float32))
    h = jnp.maximum(h, 0.0)                       # relu
    y = (jnp.dot(h.astype(jnp.bfloat16), w2_ref[...],
                 preferred_element_type=jnp.float32)
         + b2_ref[...].astype(jnp.float32))
    z = x + y                                     # residual
    mu = jnp.mean(z, axis=-1, keepdims=True)
    var = jnp.mean(jnp.square(z - mu), axis=-1, keepdims=True)
    zn = (z - mu) * jax.lax.rsqrt(var + 1e-5)
    o_ref[...] = (zn * g_ref[...].astype(jnp.float32)
                  + beta_ref[...].astype(jnp.float32)).astype(o_ref.dtype)


def ffn_layernorm(x2d, w1, b1, w2, b2, gamma, beta, tile=512):
    N, D = x2d.shape
    Dff = w1.shape[1]
    tn = _row_tile(N, tile)
    Np = _round_up(N, tn)
    xp = _pad_rows(x2d, Np)
    out = pl.pallas_call(
        _ffn_ln_kernel,
        out_shape=jax.ShapeDtypeStruct((Np, D), x2d.dtype),
        grid=(Np // tn,),
        in_specs=[
            pl.BlockSpec((tn, D), lambda i: (i, 0)),
            pl.BlockSpec((D, Dff), lambda i: (0, 0)),
            pl.BlockSpec((1, Dff), lambda i: (0, 0)),
            pl.BlockSpec((Dff, D), lambda i: (0, 0)),
            pl.BlockSpec((1, D), lambda i: (0, 0)),
            pl.BlockSpec((1, D), lambda i: (0, 0)),
            pl.BlockSpec((1, D), lambda i: (0, 0)),
        ],
        out_specs=pl.BlockSpec((tn, D), lambda i: (i, 0)),
        compiler_params=pltpu.CompilerParams(
            dimension_semantics=("parallel",),
            vmem_limit_bytes=_VMEM_LIMIT),
    )(xp, w1, b1, w2, b2, gamma, beta)
    return out if Np == N else out[:N]


# ----------------------------------------------------------------------------
# fused final LayerNorm + Linear(d_model, 1)
# ----------------------------------------------------------------------------
def _norm_proj_kernel(x_ref, g_ref, b_ref, wp_ref, bp_ref, o_ref):
    x = x_ref[...].astype(jnp.float32)
    mu = jnp.mean(x, axis=-1, keepdims=True)
    var = jnp.mean(jnp.square(x - mu), axis=-1, keepdims=True)
    xn = (x - mu) * jax.lax.rsqrt(var + 1e-5)
    xn = xn * g_ref[...].astype(jnp.float32) + b_ref[...].astype(jnp.float32)
    # Linear(d_model, 1) as a VPU lane reduction (avoids a 1-column MXU matmul).
    o_ref[...] = (jnp.sum(xn * wp_ref[...].astype(jnp.float32),
                          axis=-1, keepdims=True)
                  + bp_ref[...].astype(jnp.float32)).astype(o_ref.dtype)


def norm_project(x2d, gamma, beta, wp_row, bp, tile=512):
    N, D = x2d.shape
    tn = _row_tile(N, tile)
    Np = _round_up(N, tn)
    xp = _pad_rows(x2d, Np)
    out = pl.pallas_call(
        _norm_proj_kernel,
        out_shape=jax.ShapeDtypeStruct((Np, 1), x2d.dtype),
        grid=(Np // tn,),
        in_specs=[
            pl.BlockSpec((tn, D), lambda i: (i, 0)),
            pl.BlockSpec((1, D), lambda i: (0, 0)),
            pl.BlockSpec((1, D), lambda i: (0, 0)),
            pl.BlockSpec((1, D), lambda i: (0, 0)),
            pl.BlockSpec((1, 1), lambda i: (0, 0)),
        ],
        out_specs=pl.BlockSpec((tn, 1), lambda i: (i, 0)),
        compiler_params=pltpu.CompilerParams(
            dimension_semantics=("parallel",),
            vmem_limit_bytes=_VMEM_LIMIT),
    )(xp, gamma, beta, wp_row, bp)
    return out if Np == N else out[:N]


# ----------------------------------------------------------------------------
# Parameter init (deterministic, PyTorch-Linear-style uniform init)
# ----------------------------------------------------------------------------
def _lin_init(key, din, dout, *, w_dtype=jnp.bfloat16):
    k1, k2 = jax.random.split(key)
    bound = 1.0 / math.sqrt(din)
    w = jax.random.uniform(k1, (din, dout), jnp.float32, -bound, bound).astype(w_dtype)
    b = jax.random.uniform(k2, (1, dout), jnp.float32, -bound, bound)
    return w, b


def init_decoder_params(key, n_layers, d_model, n_heads, d_ff):
    params = {"layers": []}
    keys = iter(jax.random.split(key, n_layers * 10 + 1))
    for _ in range(n_layers):
        lp = {}
        for name in ("self", "cross"):
            wq, bq = _lin_init(next(keys), d_model, d_model)
            wk, bk = _lin_init(next(keys), d_model, d_model)
            wv, bv = _lin_init(next(keys), d_model, d_model)
            wo, bo = _lin_init(next(keys), d_model, d_model)
            lp[name] = dict(wq=wq, bq=bq,
                            wkv=jnp.concatenate([wk, wv], axis=1),   # [D, 2D] bf16
                            bkv=jnp.concatenate([bk, bv], axis=1),   # [1, 2D] f32
                            wo=wo, bo=bo)
        w1, b1 = _lin_init(next(keys), d_model, d_ff)       # conv1 (k=1) as matmul
        w2, b2 = _lin_init(next(keys), d_ff, d_model)       # conv2 (k=1) as matmul
        lp["ffn"] = dict(w1=w1, b1=b1, w2=w2, b2=b2)
        for nm in ("norm1", "norm2", "norm3"):
            lp[nm] = dict(gamma=jnp.ones((1, d_model), jnp.float32),
                          beta=jnp.zeros((1, d_model), jnp.float32))
        params["layers"].append(lp)
    # final decoder norm (standard Informer config passes nn.LayerNorm(d_model))
    params["norm"] = dict(gamma=jnp.ones((1, d_model), jnp.float32),
                          beta=jnp.zeros((1, d_model), jnp.float32))
    wp, bp = _lin_init(next(keys), d_model, 1, w_dtype=jnp.float32)  # Linear(D, 1)
    params["proj"] = dict(w=jnp.transpose(wp), b=bp)                 # stored as [1, D]
    params["n_heads"] = n_heads
    return params


# ----------------------------------------------------------------------------
# Model forward (glue in JAX, compute in Pallas kernels)
# ----------------------------------------------------------------------------
def decoder_forward(params, x, enc_output, self_attn_mask=None, cross_attn_mask=None,
                    *, self_attn_causal=True):
    """x: [B, L_dec, D], enc_output: [B, L_enc, D] -> [B, L_dec, 1].

    Masks are additive biases [B, L_q, L_k] (-inf to mask).  When
    self_attn_mask is None and self_attn_causal=True, a causal mask is
    generated in-kernel (matches Informer's FullAttention(mask_flag=True)).
    Dropout is identity (eval mode).
    """
    B, L, D = x.shape
    Lenc = enc_output.shape[1]
    H = params["n_heads"]
    scale = 1.0 / math.sqrt(D // H)

    x2d = x.reshape(B * L, D)
    enc2d = enc_output.reshape(B * Lenc, D)

    for lp in params["layers"]:
        # ---- x = norm1(x + self_attn(x, x, x)) ------------------------------
        sp = lp["self"]
        kv = linear(x2d, sp["wkv"], sp["bkv"], out_dtype=jnp.bfloat16)     # K|V
        x2d = attn_block_layernorm(
            x2d.reshape(B, L, D), kv.reshape(B, L, 2 * D),
            sp["wq"], sp["bq"], sp["wo"], sp["bo"],
            lp["norm1"]["gamma"], lp["norm1"]["beta"],
            n_heads=H, scale=scale,
            causal=(self_attn_causal and self_attn_mask is None),
            bias=self_attn_mask).reshape(B * L, D)

        # ---- x = norm2(x + cross_attn(x, enc, enc)) --------------------------
        cp = lp["cross"]
        kvc = linear(enc2d, cp["wkv"], cp["bkv"], out_dtype=jnp.bfloat16)  # K|V
        x2d = attn_block_layernorm(
            x2d.reshape(B, L, D), kvc.reshape(B, Lenc, 2 * D),
            cp["wq"], cp["bq"], cp["wo"], cp["bo"],
            lp["norm2"]["gamma"], lp["norm2"]["beta"],
            n_heads=H, scale=scale, causal=False,
            bias=cross_attn_mask).reshape(B * L, D)

        # ---- x = norm3(x + conv2(relu(conv1(x)))) ----------------------------
        f = lp["ffn"]
        x2d = ffn_layernorm(x2d, f["w1"], f["b1"], f["w2"], f["b2"],
                            lp["norm3"]["gamma"], lp["norm3"]["beta"])

    # ---- final norm + projection Linear(d_model, 1), fused ------------------
    out = norm_project(x2d, params["norm"]["gamma"], params["norm"]["beta"],
                       params["proj"]["w"], params["proj"]["b"])
    return out.reshape(B, L, 1)


# ----------------------------------------------------------------------------
if __name__ == "__main__":
    B, L_DEC, L_ENC = 2, 8, 16
    D_MODEL, N_HEADS, D_FF, N_LAYERS = 32, 4, 64, 2

    key = jax.random.PRNGKey(0)
    k_par, k_x, k_enc = jax.random.split(key, 3)

    params = init_decoder_params(k_par, N_LAYERS, D_MODEL, N_HEADS, D_FF)
    x = jax.random.normal(k_x, (B, L_DEC, D_MODEL), jnp.float32)
    enc_output = jax.random.normal(k_enc, (B, L_ENC, D_MODEL), jnp.float32)

    out = decoder_forward(params, x, enc_output,
                          self_attn_mask=None, cross_attn_mask=None)
    out = jax.block_until_ready(out)
    assert out.shape == (B, L_DEC, 1), out.shape
    print("KERNEL_OK")
</pallas_src>

<mosaic_0001>
module attributes {stable_mosaic.version = 11 : i64} {
  func.func @_linear_kernel(%arg0: i32, %arg1: memref<16x32xf32, #tpu.memory_space<vmem>>, %arg2: memref<32x64xbf16, #tpu.memory_space<vmem>>, %arg3: memref<1x64xf32, #tpu.memory_space<vmem>>, %arg4: memref<16x64xbf16, #tpu.memory_space<vmem>>) attributes {dimension_semantics = [#tpu.dimension_semantics<parallel>], iteration_bounds = array<i64: 1>, scalar_prefetch = 0 : i64, scratch_operands = 0 : i64, tpu.core_type = #tpu.core_type<tc>, window_params = [{transform_indices = @transform_0, window_bounds = array<i64: 16, 32>}, {pipeline_mode = #tpu.pipeline_mode<synchronous>, transform_indices = @transform_1, window_bounds = array<i64: 32, 64>}, {pipeline_mode = #tpu.pipeline_mode<synchronous>, transform_indices = @transform_2, window_bounds = array<i64: 1, 64>}, {transform_indices = @transform_3, window_bounds = array<i64: 16, 64>}]} {
    %c0 = arith.constant 0 : index
    %c0_0 = arith.constant 0 : index
    %0 = vector.load %arg1[%c0, %c0_0] : memref<16x32xf32, #tpu.memory_space<vmem>>, vector<16x32xf32>
    %1 = arith.truncf %0 : vector<16x32xf32> to vector<16x32xbf16>
    %c0_1 = arith.constant 0 : index
    %c0_2 = arith.constant 0 : index
    %2 = vector.load %arg2[%c0_1, %c0_2] : memref<32x64xbf16, #tpu.memory_space<vmem>>, vector<32x64xbf16>
    %cst = arith.constant dense<0.000000e+00> : vector<16x64xf32>
    %3 = tpu.matmul %1, %2, %cst {dimension_numbers = #tpu.dot_dimension_numbers<[1], [0], [0], [1], [0, 0, 1, 1], [], []>} : vector<16x32xbf16>, vector<32x64xbf16>, vector<16x64xf32> -> vector<16x64xf32>
    %c0_3 = arith.constant 0 : index
    %c0_4 = arith.constant 0 : index
    %4 = vector.load %arg3[%c0_3, %c0_4] : memref<1x64xf32, #tpu.memory_space<vmem>>, vector<1x64xf32>
    %5 = vector.broadcast %4 : vector<1x64xf32> to vector<16x64xf32>
    %6 = arith.addf %3, %5 : vector<16x64xf32>
    %7 = arith.truncf %6 : vector<16x64xf32> to vector<16x64xbf16>
    %c0_5 = arith.constant 0 : index
    %c0_6 = arith.constant 0 : index
    %8 = vector.load %arg4[%c0_5, %c0_6] : memref<16x64xbf16, #tpu.memory_space<vmem>>, vector<16x64xbf16>
    tpu.vector_store %arg4[%c0_5, %c0_6], %7 {strides = array<i32>} : memref<16x64xbf16, #tpu.memory_space<vmem>>, vector<16x64xbf16>,
    return
  }
  func.func @transform_0(%arg0: i32) -> (i32, i32) {
    %c0_i32 = arith.constant 0 : i32
    %c0_i32_0 = arith.constant 0 : i32
    return %arg0, %c0_i32 : i32, i32
  }
  func.func @transform_1(%arg0: i32) -> (i32, i32) {
    %c0_i32 = arith.constant 0 : i32
    %c0_i32_0 = arith.constant 0 : i32
    %c0_i32_1 = arith.constant 0 : i32
    return %c0_i32, %c0_i32_0 : i32, i32
  }
  func.func @transform_2(%arg0: i32) -> (i32, i32) {
    %c0_i32 = arith.constant 0 : i32
    %c0_i32_0 = arith.constant 0 : i32
    %c0_i32_1 = arith.constant 0 : i32
    return %c0_i32, %c0_i32_0 : i32, i32
  }
  func.func @transform_3(%arg0: i32) -> (i32, i32) {
    %c0_i32 = arith.constant 0 : i32
    %c0_i32_0 = arith.constant 0 : i32
    return %arg0, %c0_i32 : i32, i32
  }
}

</mosaic_0001>

<llo_original>
// kernel: tpu_custom_call.1
$region0: #{tpu_custom_call.1}
  #allocation0 [shape = 'u32[]', space=smem, size = 0x4, offset = 0x4, fixed_abs, tag = 'smem constant byte address 0x4 - core index']
  #allocation1 [shape = 'u32[144,128]{1,0:T(1,128)}', space=vmem, size = 0x12000, scoped, tag = 'internal scratch']
  %s0 = inlined_call_operand.hbm [shape: f32[16,32], index: 0, kind: input, shape index: {}]
  %s1 = inlined_call_operand.hbm [shape: bf16[32,64], index: 1, kind: input, shape index: {}]
  %s2 = inlined_call_operand.hbm [shape: f32[1,64], index: 2, kind: input, shape index: {}]
  %s3 = inlined_call_operand.hbm [shape: bf16[16,64], index: 3, kind: output, shape index: {}]
  %s4 = sld [smem:[#allocation0]]
  $region34: #{tpu_custom_call.1} parent=0
    _
  %s6 = ssub.s32 1, %s4
  %s7 = scalar_select 0, %s6, %s4
  $region1: #{tpu_custom_call.1} parent=0
    #allocation2 [shape = 'u8[8192]{0}', space=vmem, size = 0x2000, scoped, tag = 'input window, operand 0, single buffered']
    #allocation3 [shape = 's32[1]{0}', space=sflag, size = 0x4, scoped, tag = 'scoped memory for tpu_custom_call.1']
    #allocation4 [shape = 's32[1]{0}', space=sflag, size = 0x4, scoped, tag = 'scoped memory for tpu_custom_call.1']
    #allocation5 [shape = 'u8[8192]{0}', space=vmem, size = 0x2000, scoped, tag = 'input window, operand 1, single buffered']
    #allocation6 [shape = 's32[1]{0}', space=sflag, size = 0x4, scoped, tag = 'scoped memory for tpu_custom_call.1']
    #allocation7 [shape = 'u8[512]{0}', space=vmem, size = 0x400, scoped, tag = 'input window, operand 2, single buffered']
    #allocation8 [shape = 'u8[4096]{0}', space=vmem, size = 0x1000, scoped, tag = 'output window, operand 0, single buffered']
    %8 = vsyncpa [#allocation3], 0
    %9 = vsyncpa [#allocation6], 0
    %10 = vsyncpa [#allocation4], 0
    // Predicated region
    $region2: #{tpu_custom_call.1} parent=1 // pred_check
      _
    $region3: #{tpu_custom_call.1} parent=1 // pred_check_branch
      %12 = sbr.rel (0) target = $region5
    $region4: #{tpu_custom_call.1} parent=1 // pred_region
      %s14 = ssub.s32 256, 256
      %15 = vsyncadd [#allocation3], %s14
      %s16 = sshll.u32 [#allocation2], 4
      %s17 = int_to_ptr.vmem [resolvable:$true] %s16
      %22 = dma.hbm_to_vmem [thread:$0]  %s0, 256, %s17, [#allocation3], 128, 128, 8
    $region5: #{tpu_custom_call.1} parent=1 // pred_fallthru
      _
    // Predicated region
    $region6: #{tpu_custom_call.1} parent=1 // pred_check
      _
    $region7: #{tpu_custom_call.1} parent=1 // pred_check_branch
      %24 = sbr.rel (0) target = $region9
    $region8: #{tpu_custom_call.1} parent=1 // pred_region
      %s26 = ssub.s32 256, 256
      %27 = vsyncadd [#allocation6], %s26
      %s28 = sshll.u32 [#allocation5], 4
      %s29 = int_to_ptr.vmem [resolvable:$true] %s28
      %34 = dma.hbm_to_vmem [thread:$0]  %s1, 256, %s29, [#allocation6], 64, 64, 4
    $region9: #{tpu_custom_call.1} parent=1 // pred_fallthru
      _
    // Predicated region
    $region10: #{tpu_custom_call.1} parent=1 // pred_check
      _
    $region11: #{tpu_custom_call.1} parent=1 // pred_check_branch
      %36 = sbr.rel (0) target = $region13
    $region12: #{tpu_custom_call.1} parent=1 // pred_region
      %s38 = ssub.s32 16, 16
      %39 = vsyncadd [#allocation6], %s38
      %s41 = sshll.u32 [#allocation7], 4
      %s42 = int_to_ptr.vmem [resolvable:$true] %s41
      %44 = dma.hbm_to_vmem [thread:$0]  %s2, 16, %s42, [#allocation6]
    $region13: #{tpu_custom_call.1} parent=1 // pred_fallthru
      _
    // Predicated region
    $region14: #{tpu_custom_call.1} parent=1 // pred_check
      _
    $region15: #{tpu_custom_call.1} parent=1 // pred_check_branch
      %46 = sbr.rel (0) target = $region17
    $region16: #{tpu_custom_call.1} parent=1 // pred_region
      %47 = dma.done [#allocation3], 256
    $region17: #{tpu_custom_call.1} parent=1 // pred_fallthru
      _
    // Predicated region
    $region18: #{tpu_custom_call.1} parent=1 // pred_check
      _
    $region19: #{tpu_custom_call.1} parent=1 // pred_check_branch
      %49 = sbr.rel (0) target = $region21
    $region20: #{tpu_custom_call.1} parent=1 // pred_region
      %50 = dma.done [#allocation6], 256
    $region21: #{tpu_custom_call.1} parent=1 // pred_fallthru
      _
    // Predicated region
    $region22: #{tpu_custom_call.1} parent=1 // pred_check
      _
    $region23: #{tpu_custom_call.1} parent=1 // pred_check_branch
      %52 = sbr.rel (0) target = $region25
    $region24: #{tpu_custom_call.1} parent=1 // pred_region
      %53 = dma.done [#allocation6], 16
    $region25: #{tpu_custom_call.1} parent=1 // pred_fallthru
      _
    %v55 = vld [vmem:[#allocation2] sm:$0xff]
    %v56 = vld [vmem:[#allocation2 + $0x8] sm:$0xff]
    %v57 = vpack.c.bf16 %v56, %v55
    %v58 = vld [vmem:[#allocation5] sm:$0xf]
    %v59 = vld [vmem:[#allocation5 + $0x4] sm:$0xf]
    %v60 = vld [vmem:[#allocation5 + $0x8] sm:$0xf]
    %v61 = vld [vmem:[#allocation5 + $0xc] sm:$0xf]
    %v62 = vld [vmem:[#allocation7] sm:$0x1]
    %v64 = vlaneseq
    %v65 = vshrl.u32 %v64, 7
    %v66 = vsub.s32 0, %v65
    %v67 = vrot.slane %v62, %v66
    %v73 = vunpack.c.l.b16 %v58
    %v74 = vunpack.c.l.b16 %v59
    %v75 = vunpack.c.l.b16 %v60
    %v76 = vunpack.c.l.b16 %v61
    %v77 = vpack.c.b16 %v74, %v73
    %v78 = vpack.c.b16 %v76, %v75
    %vm81 = vcmask 261120
    %v83 = vsel %vm81, %v57, 0
    %85 = vmatprep.subr.bf16.mxu0 0
    %86 = vmatpush1.bf16.msra.mxu0 %v77
    %87 = vmatprep.subr.bf16.mxu0 0
    %88 = vmatpush1.bf16.msra.mxu0 %v78
    %89 = vmatprep.subr.bf16.mxu0 0
    %90 = vmatpush1.bf16.msra.mxu0 0
    %91 = vmatprep.subr.bf16.mxu0 0
    %92 = vmatpush1.bf16.msra.mxu0 0
    %93 = vmatprep.subr.bf16.mxu0 0
    %94 = vmatpush1.bf16.msra.mxu0 0
    %95 = vmatprep.subr.bf16.mxu0 0
    %96 = vmatpush1.bf16.msra.mxu0 0
    %97 = vmatprep.subr.bf16.mxu0 0
    %98 = vmatpush1.bf16.msra.mxu0 0
    %99 = vmatprep.subr.bf16.mxu0 0
    %100 = vmatpush1.bf16.msra.mxu0 0
    %101 = vmatprep.subr.bf16.mxu0 0
    %102 = vmatpush1.bf16.msra.mxu0 0
    %103 = vmatprep.subr.bf16.mxu0 0
    %104 = vmatpush1.bf16.msra.mxu0 0
    %105 = vmatprep.subr.bf16.mxu0 0
    %106 = vmatpush1.bf16.msra.mxu0 0
    %107 = vmatprep.subr.bf16.mxu0 0
    %108 = vmatpush1.bf16.msra.mxu0 0
    %109 = vmatprep.subr.bf16.mxu0 0
    %110 = vmatpush1.bf16.msra.mxu0 0
    %111 = vmatprep.subr.bf16.mxu0 0
    %112 = vmatpush1.bf16.msra.mxu0 0
    %113 = vmatprep.subr.bf16.mxu0 0
    %114 = vmatpush1.bf16.msra.mxu0 0
    %115 = vmatprep.subr.bf16.mxu0 0
    %116 = vmatpush1.bf16.msra.mxu0 0
    %117 = vmatprep.mubr.bf16.mxu0 0
    %118 = vmatmul.mubr.bf16.gmra.mrb[0].mxu0 %v83
    %v119 = vpop.f32.mrb[0].mxu0
    %v120 = vadd.f32 %v67, %v119
    %v121 = vpop.f32.mrb[0].mxu0
    %v122 = vpop.f32.mrb[0].mxu0
    %v123 = vadd.f32 %v67, %v122
    %v124 = vpop.f32.mrb[0].mxu0
    %125 = vdwg.mxu0
    %v126 = vpack.c.bf16 %v123, %v120
    %v128 = vunpack.c.l.b16 %v126
    %v129 = vunpack.c.h.b16 %v126
    %v130 = vpack.c.b16 %v128, %v128
    %v131 = vpack.c.b16 %v129, %v129
    %vm134 = vcmask 519168
    %135 = vst.msk [vmem:[#allocation8] sm:$0xf] %vm134, %v130
    %136 = vst.msk [vmem:[#allocation8 + $0x4] sm:$0xf] %vm134, %v131
    // Predicated region
    $region26: #{tpu_custom_call.1} parent=1 // pred_check
      _
    $region27: #{tpu_custom_call.1} parent=1 // pred_check_branch
      %138 = sbr.rel (0) target = $region29
    $region28: #{tpu_custom_call.1} parent=1 // pred_region
      %s140 = ssub.s32 128, 128
      %141 = vsyncadd [#allocation4], %s140
      %s142 = sshll.u32 [#allocation8], 4
      %s143 = int_to_ptr.vmem [resolvable:$true] %s142
      %148 = dma.vmem_to_hbm [thread:$0]  %s143, 128, %s3, [#allocation4], 64, 64, 4
    $region29: #{tpu_custom_call.1} parent=1 // pred_fallthru
      _
    // Predicated region
    $region30: #{tpu_custom_call.1} parent=1 // pred_check
      _
    $region31: #{tpu_custom_call.1} parent=1 // pred_check_branch
      %150 = sbr.rel (0) target = $region33
    $region32: #{tpu_custom_call.1} parent=1 // pred_region
      %151 = dma.done [#allocation4], 128
    $region33: #{tpu_custom_call.1} parent=1 // pred_fallthru
      _
    %152 = vsyncpa [#allocation3], 1
    %153 = vsyncpa [#allocation6], 1
    %154 = vsyncpa [#allocation4], 1

</llo_original>
